<compile_context>
chip_gen: v6e
topology: v6e:2x2x1
jax: 0.10.0
libtpu: 0.0.40
codegen_flags: <defaults>
</compile_context>

<pallas_src>
import functools

import jax
import jax.numpy as jnp
from jax import lax
from jax.experimental import pallas as pl
from jax.experimental.pallas import tpu as pltpu


# --------------------------------------------------------------------------- #
# Tiling heuristics
# --------------------------------------------------------------------------- #
def _vmem_estimate(bblk, lt, c_in, c_out, K, cbytes):
    """Rough per-grid-step VMEM working set (bytes): double-buffered I/O tiles
    plus the folded im2col slabs and f32 intermediates (with slop)."""
    lanes = bblk * lt
    x_t = bblk * c_in * lt * cbytes
    o_t = bblk * c_out * lt * 4
    slab1 = K * c_in * lanes * cbytes
    slab2 = K * c_out * lanes * cbytes
    h = c_out * lanes * 4
    return 2 * (x_t + o_t) + slab1 + slab2 + 4 * h


def _pick_time_tile(L, halo, max_tile):
    """Largest divisor of L that is a multiple of 128, <= max_tile and >= the
    causal halo; falls back to the whole sequence (single tile)."""
    if L <= max_tile:
        return L
    lt = (max_tile // 128) * 128
    while lt >= 128:
        if L % lt == 0 and lt >= halo:
            return lt
        lt -= 128
    return L


def _pick_batch_block(B, lt, c_in, c_out, K, cbytes, vmem_budget, lane_target=512):
    """Smallest batch block whose folded lane width (Bblk*Lt) reaches the MXU
    N-target while fitting the VMEM budget; otherwise the largest that fits."""
    divs = [d for d in range(1, B + 1) if B % d == 0]
    fitting = [d for d in divs
               if _vmem_estimate(d, lt, c_in, c_out, K, cbytes) <= vmem_budget]
    if not fitting:
        return 1
    enough = [d for d in fitting if d * lt >= lane_target]
    if enough:
        return min(enough)      # fills the MXU N dim with the most parallel steps
    return max(fitting)         # cannot reach the target; amortize step overhead


# --------------------------------------------------------------------------- #
# Kernel
# --------------------------------------------------------------------------- #
def _temporal_block_kernel(x_ref, w1_ref, b1_ref, w2_ref, b2_ref, *rest,
                           K, dilation, Lt, Bblk, n_t, halo, use_downsample,
                           compute_dtype):
    if use_downsample:
        wd_ref, bd_ref, o_ref, xt_ref, ht_ref = rest
    else:
        wd_ref = bd_ref = None
        o_ref, xt_ref, ht_ref = rest

    t = pl.program_id(1)

    # Causal carry: zero the left-halo buffers at the start of every sequence.
    @pl.when(t == 0)
    def _():
        xt_ref[...] = jnp.zeros_like(xt_ref)
        ht_ref[...] = jnp.zeros_like(ht_ref)

    w1 = w1_ref[...]                       # (C_out, K*C_in)   compute dtype
    w2 = w2_ref[...]                       # (C_out, K*C_out)  compute dtype
    b1 = b1_ref[...]                       # (C_out, 1) f32
    b2 = b2_ref[...]                       # (C_out, 1) f32

    x = x_ref[...]                         # (Bblk, C_in, Lt)  compute dtype
    x_tail = xt_ref[...]                   # (Bblk, C_in, halo) prev-tile tail
    h_tail = ht_ref[...]                   # (Bblk, C_out, halo)

    def fold(parts):                       # lane-concat batch elements
        return parts[0] if len(parts) == 1 else jnp.concatenate(parts, axis=-1)

    def slab(windows):
        # windows: Bblk arrays (C, halo+Lt) -> stacked dilated taps (K*C, Bblk*Lt)
        taps = []
        for k in range(K):
            s = (K - 1 - k) * dilation     # causal delay of tap k (== Chomp1d)
            taps.append(fold([w[:, halo - s: halo - s + Lt] for w in windows]))
        return taps[0] if K == 1 else jnp.concatenate(taps, axis=0)

    # ---- conv1: all taps & all Bblk batches as ONE stacked MXU matmul -------
    if halo > 0:
        win1 = [jnp.concatenate([x_tail[b], x[b]], axis=-1) for b in range(Bblk)]
    else:
        win1 = [x[b] for b in range(Bblk)]
    h1 = jnp.maximum(
        jnp.dot(w1, slab(win1), preferred_element_type=jnp.float32) + b1, 0.0)
    h1c = h1.astype(compute_dtype)         # (C_out, Bblk*Lt)
    # TODO(synk): nn.Dropout is identity at inference; training-mode stochastic
    # dropout is intentionally not implemented.

    # ---- update carries for the next time tile (old tails already read) -----
    if n_t > 1 and halo > 0:
        xt_ref[...] = x[:, :, Lt - halo:]
        for b in range(Bblk):
            ht_ref[b, :, :] = h1c[:, (b + 1) * Lt - halo:(b + 1) * Lt]

    # ---- conv2: same stacked-tap single matmul on h1 ------------------------
    if halo > 0:
        win2 = [jnp.concatenate([h_tail[b], h1c[:, b * Lt:(b + 1) * Lt]], axis=-1)
                for b in range(Bblk)]
    else:
        win2 = [h1c[:, b * Lt:(b + 1) * Lt] for b in range(Bblk)]
    h2 = jnp.maximum(
        jnp.dot(w2, slab(win2), preferred_element_type=jnp.float32) + b2, 0.0)

    # ---- residual (1x1 downsample conv if C_in != C_out) + final ReLU -------
    xf = fold([x[b] for b in range(Bblk)])                  # (C_in, Bblk*Lt)
    if use_downsample:
        res = jnp.dot(wd_ref[...], xf,
                      preferred_element_type=jnp.float32) + bd_ref[...]
    else:
        res = xf.astype(jnp.float32)
    out = jnp.maximum(h2 + res, 0.0).astype(o_ref.dtype)    # (C_out, Bblk*Lt)
    for b in range(Bblk):
        o_ref[b, :, :] = out[:, b * Lt:(b + 1) * Lt]


# --------------------------------------------------------------------------- #
# Wrapper
# --------------------------------------------------------------------------- #
def temporal_block_forward(x_ncw, params, *, kernel_size, dilation,
                           compute_dtype=jnp.float32, max_time_tile=2048,
                           vmem_budget_bytes=10 * 1024 * 1024):
    """x_ncw: (B, C_in, L) float32 (PyTorch NCW). Returns (B, C_out, L) f32.

    compute_dtype=jnp.bfloat16 feeds bf16 operands (weights AND activations) to
    the MXU; accumulation and the bias/ReLU/residual tail stay f32.
    """
    w1, b1, w2, b2, wd, bd = params        # torch layouts: w (C_out, C_in, K)
    B, C_in, L = x_ncw.shape
    C_out = w1.shape[0]
    K = kernel_size
    halo = (K - 1) * dilation              # == PyTorch padding / chomp size
    use_downsample = (C_in != C_out)
    cbytes = jnp.dtype(compute_dtype).itemsize

    # Parameter-only prep (tiny, one-time): stack the K taps so each conv is a
    # single (C_out, K*C) x (K*C, Bblk*Lt) matmul; pre-cast to compute dtype.
    w1_s = jnp.transpose(w1, (0, 2, 1)).reshape(C_out, K * C_in).astype(compute_dtype)
    w2_s = jnp.transpose(w2, (0, 2, 1)).reshape(C_out, K * C_out).astype(compute_dtype)
    b1_s = b1.reshape(C_out, 1).astype(jnp.float32)
    b2_s = b2.reshape(C_out, 1).astype(jnp.float32)
    x_in = x_ncw.astype(compute_dtype)

    Lt = _pick_time_tile(L, halo, max_time_tile)
    n_t = L // Lt
    Bblk = _pick_batch_block(B, Lt, C_in, C_out, K, cbytes, vmem_budget_bytes)
    n_b = B // Bblk

    args = [x_in, w1_s, b1_s, w2_s, b2_s]
    in_specs = [
        pl.BlockSpec((Bblk, C_in, Lt), lambda g, t: (g, 0, t)),      # x (NCW)
        pl.BlockSpec((C_out, K * C_in), lambda g, t: (0, 0)),        # w1 stacked
        pl.BlockSpec((C_out, 1), lambda g, t: (0, 0)),               # b1
        pl.BlockSpec((C_out, K * C_out), lambda g, t: (0, 0)),       # w2 stacked
        pl.BlockSpec((C_out, 1), lambda g, t: (0, 0)),               # b2
    ]
    if use_downsample:
        wd_s = wd[:, :, 0].astype(compute_dtype)                     # (C_out, C_in)
        bd_s = bd.reshape(C_out, 1).astype(jnp.float32)
        args += [wd_s, bd_s]
        in_specs += [pl.BlockSpec((C_out, C_in), lambda g, t: (0, 0)),
                     pl.BlockSpec((C_out, 1), lambda g, t: (0, 0))]

    halo_alloc = max(halo, 1)
    est = _vmem_estimate(Bblk, Lt, C_in, C_out, K, cbytes)
    vmem_limit = int(min(max(2 * est, 32 * 1024 * 1024), 48 * 1024 * 1024))

    kernel = functools.partial(
        _temporal_block_kernel, K=K, dilation=dilation, Lt=Lt, Bblk=Bblk,
        n_t=n_t, halo=halo, use_downsample=use_downsample,
        compute_dtype=compute_dtype)

    return pl.pallas_call(
        kernel,
        out_shape=jax.ShapeDtypeStruct((B, C_out, L), jnp.float32),
        grid_spec=pltpu.PrefetchScalarGridSpec(
            num_scalar_prefetch=0,
            grid=(n_b, n_t),
            in_specs=in_specs,
            out_specs=pl.BlockSpec((Bblk, C_out, Lt), lambda g, t: (g, 0, t)),
            scratch_shapes=[
                pltpu.VMEM((Bblk, C_in, halo_alloc), compute_dtype),   # x tail
                pltpu.VMEM((Bblk, C_out, halo_alloc), compute_dtype),  # h1 tail
            ]),
        compiler_params=pltpu.CompilerParams(
            dimension_semantics=("parallel", "arbitrary"),
            vmem_limit_bytes=vmem_limit),
    )(*args)


# --------------------------------------------------------------------------- #
# Params + pure-JAX reference (inference mode)
# --------------------------------------------------------------------------- #
def make_params(key, n_inputs, n_outputs, kernel_size):
    """Deterministic synthetic params mirroring weight_norm(nn.Conv1d) + init_weights."""
    ks = jax.random.split(key, 6)
    v1 = 0.01 * jax.random.normal(ks[0], (n_outputs, n_inputs, kernel_size), jnp.float32)
    v2 = 0.01 * jax.random.normal(ks[1], (n_outputs, n_outputs, kernel_size), jnp.float32)
    b1 = 0.01 * jax.random.normal(ks[2], (n_outputs,), jnp.float32)
    b2 = 0.01 * jax.random.normal(ks[3], (n_outputs,), jnp.float32)
    # weight_norm (dim=0): w = g * v / ||v||, with g initialised so that w == v.
    n1 = jnp.sqrt(jnp.sum(v1 ** 2, axis=(1, 2), keepdims=True))
    n2 = jnp.sqrt(jnp.sum(v2 ** 2, axis=(1, 2), keepdims=True))
    w1 = n1 * v1 / n1
    w2 = n2 * v2 / n2
    if n_inputs != n_outputs:
        wd = 0.01 * jax.random.normal(ks[4], (n_outputs, n_inputs, 1), jnp.float32)
        bd = 0.01 * jax.random.normal(ks[5], (n_outputs,), jnp.float32)
    else:
        wd, bd = None, None
    return (w1, b1, w2, b2, wd, bd)


def _reference(x_ncw, params, *, kernel_size, dilation):
    """Pure-JAX reference mirroring the PyTorch forward (inference mode)."""
    w1, b1, w2, b2, wd, bd = params
    pad = (kernel_size - 1) * dilation
    L = x_ncw.shape[-1]

    def conv_chomp_relu(x, w, b):
        y = lax.conv_general_dilated(
            x, w, window_strides=(1,), padding=[(pad, pad)],
            rhs_dilation=(dilation,), dimension_numbers=("NCH", "OIH", "NCH"))
        y = y[:, :, :L] + b[None, :, None]          # Chomp1d + bias
        return jnp.maximum(y, 0.0)

    out = conv_chomp_relu(conv_chomp_relu(x_ncw, w1, b1), w2, b2)
    if wd is not None:
        res = lax.conv_general_dilated(
            x_ncw, wd, window_strides=(1,), padding=[(0, 0)],
            dimension_numbers=("NCH", "OIH", "NCH")) + bd[None, :, None]
    else:
        res = x_ncw
    return jnp.maximum(out + res, 0.0)


# --------------------------------------------------------------------------- #
# Self-test
# --------------------------------------------------------------------------- #
if __name__ == "__main__":
    key = jax.random.PRNGKey(0)
    kx1, kx2, kx3, kp1, kp2, kp3 = jax.random.split(key, 6)
    K = 3

    # case 1: toy shape, downsample residual (4 -> 8), f32, single time tile,
    # both batch elements folded into one matmul per conv.
    B, L, d = 2, 16, 2
    x = jax.random.normal(kx1, (B, 4, L), jnp.float32)            # NCW
    p = make_params(kp1, 4, 8, K)
    out = jax.block_until_ready(
        temporal_block_forward(x, p, kernel_size=K, dilation=d))
    ref = jax.block_until_ready(_reference(x, p, kernel_size=K, dilation=d))
    assert out.shape == (B, 8, L), out.shape
    assert jnp.allclose(out, ref, rtol=1e-5, atol=1e-5), \
        float(jnp.max(jnp.abs(out - ref)))

    # case 2: identity residual path (8 -> 8), f32.
    x2 = jax.random.normal(kx2, (B, 8, L), jnp.float32)
    p2 = make_params(kp2, 8, 8, K)
    out2 = jax.block_until_ready(
        temporal_block_forward(x2, p2, kernel_size=K, dilation=d))
    ref2 = jax.block_until_ready(_reference(x2, p2, kernel_size=K, dilation=d))
    assert jnp.allclose(out2, ref2, rtol=1e-5, atol=1e-5), \
        float(jnp.max(jnp.abs(out2 - ref2)))

    # case 3: bf16 MXU operands (v6e/v7x fast path) on case-1 data, loose tol.
    out_bf = jax.block_until_ready(
        temporal_block_forward(x, p, kernel_size=K, dilation=d,
                               compute_dtype=jnp.bfloat16))
    assert jnp.allclose(out_bf, ref, rtol=0.1, atol=0.1), \
        float(jnp.max(jnp.abs(out_bf - ref)))

    # case 4: longer sequence forced through the L-tiled causal-carry path
    # (Lt=128 -> 3 sequential time tiles), downsample residual, dilation 4.
    B4, L4, d4 = 2, 384, 4
    x4 = jax.random.normal(kx3, (B4, 4, L4), jnp.float32)
    p4 = make_params(kp3, 4, 8, K)
    out4 = jax.block_until_ready(
        temporal_block_forward(x4, p4, kernel_size=K, dilation=d4,
                               max_time_tile=128))
    ref4 = jax.block_until_ready(_reference(x4, p4, kernel_size=K, dilation=d4))
    assert out4.shape == (B4, 8, L4), out4.shape
    assert jnp.allclose(out4, ref4, rtol=1e-4, atol=1e-5), \
        float(jnp.max(jnp.abs(out4 - ref4)))

    print("KERNEL_OK")
</pallas_src>

<mosaic_0001>
module attributes {stable_mosaic.version = 11 : i64} {
  func.func @_temporal_block_kernel(%arg0: i32, %arg1: i32, %arg2: memref<2x4x16xf32, #tpu.memory_space<vmem>>, %arg3: memref<8x12xf32, #tpu.memory_space<vmem>>, %arg4: memref<8x1xf32, #tpu.memory_space<vmem>>, %arg5: memref<8x24xf32, #tpu.memory_space<vmem>>, %arg6: memref<8x1xf32, #tpu.memory_space<vmem>>, %arg7: memref<8x4xf32, #tpu.memory_space<vmem>>, %arg8: memref<8x1xf32, #tpu.memory_space<vmem>>, %arg9: memref<2x8x16xf32, #tpu.memory_space<vmem>>, %arg10: memref<2x4x4xf32, #tpu.memory_space<vmem>>, %arg11: memref<2x8x4xf32, #tpu.memory_space<vmem>>) attributes {dimension_semantics = [#tpu.dimension_semantics<parallel>, #tpu.dimension_semantics<arbitrary>], iteration_bounds = array<i64: 1, 1>, scalar_prefetch = 0 : i64, scratch_operands = 2 : i64, tpu.core_type = #tpu.core_type<tc>, window_params = [{transform_indices = @transform_0, window_bounds = array<i64: 2, 4, 16>}, {pipeline_mode = #tpu.pipeline_mode<synchronous>, transform_indices = @transform_1, window_bounds = array<i64: 8, 12>}, {pipeline_mode = #tpu.pipeline_mode<synchronous>, transform_indices = @transform_2, window_bounds = array<i64: 8, 1>}, {pipeline_mode = #tpu.pipeline_mode<synchronous>, transform_indices = @transform_3, window_bounds = array<i64: 8, 24>}, {pipeline_mode = #tpu.pipeline_mode<synchronous>, transform_indices = @transform_4, window_bounds = array<i64: 8, 1>}, {pipeline_mode = #tpu.pipeline_mode<synchronous>, transform_indices = @transform_5, window_bounds = array<i64: 8, 4>}, {pipeline_mode = #tpu.pipeline_mode<synchronous>, transform_indices = @transform_6, window_bounds = array<i64: 8, 1>}, {transform_indices = @transform_7, window_bounds = array<i64: 2, 8, 16>}]} {
    %c0_i32 = arith.constant 0 : i32
    %0 = arith.cmpi eq, %arg1, %c0_i32 : i32
    %1 = arith.extui %0 : i1 to i32
    %c0_i32_0 = arith.constant 0 : i32
    %2 = arith.cmpi ne, %1, %c0_i32_0 : i32
    scf.if %2 {
      %cst_31 = arith.constant 0.000000e+00 : f32
      %79 = vector.broadcast %cst_31 : f32 to vector<2x4x4xf32>
      %c0_32 = arith.constant 0 : index
      %c0_33 = arith.constant 0 : index
      %c0_34 = arith.constant 0 : index
      %80 = vector.load %arg10[%c0_32, %c0_33, %c0_34] : memref<2x4x4xf32, #tpu.memory_space<vmem>>, vector<2x4x4xf32>
      tpu.vector_store %arg10[%c0_32, %c0_33, %c0_34], %79 {strides = array<i32>} : memref<2x4x4xf32, #tpu.memory_space<vmem>>, vector<2x4x4xf32>,
      %cst_35 = arith.constant 0.000000e+00 : f32
      %81 = vector.broadcast %cst_35 : f32 to vector<2x8x4xf32>
      %c0_36 = arith.constant 0 : index
      %c0_37 = arith.constant 0 : index
      %c0_38 = arith.constant 0 : index
      %82 = vector.load %arg11[%c0_36, %c0_37, %c0_38] : memref<2x8x4xf32, #tpu.memory_space<vmem>>, vector<2x8x4xf32>
      tpu.vector_store %arg11[%c0_36, %c0_37, %c0_38], %81 {strides = array<i32>} : memref<2x8x4xf32, #tpu.memory_space<vmem>>, vector<2x8x4xf32>,
    } else {
    }
    %c0 = arith.constant 0 : index
    %c0_1 = arith.constant 0 : index
    %3 = vector.load %arg3[%c0, %c0_1] : memref<8x12xf32, #tpu.memory_space<vmem>>, vector<8x12xf32>
    %c0_2 = arith.constant 0 : index
    %c0_3 = arith.constant 0 : index
    %4 = vector.load %arg5[%c0_2, %c0_3] : memref<8x24xf32, #tpu.memory_space<vmem>>, vector<8x24xf32>
    %c0_4 = arith.constant 0 : index
    %c0_5 = arith.constant 0 : index
    %5 = vector.load %arg4[%c0_4, %c0_5] : memref<8x1xf32, #tpu.memory_space<vmem>>, vector<8x1xf32>
    %c0_6 = arith.constant 0 : index
    %c0_7 = arith.constant 0 : index
    %6 = vector.load %arg6[%c0_6, %c0_7] : memref<8x1xf32, #tpu.memory_space<vmem>>, vector<8x1xf32>
    %c0_8 = arith.constant 0 : index
    %c0_9 = arith.constant 0 : index
    %c0_10 = arith.constant 0 : index
    %7 = vector.load %arg2[%c0_8, %c0_9, %c0_10] : memref<2x4x16xf32, #tpu.memory_space<vmem>>, vector<2x4x16xf32>
    %c0_11 = arith.constant 0 : index
    %c0_12 = arith.constant 0 : index
    %c0_13 = arith.constant 0 : index
    %8 = vector.load %arg10[%c0_11, %c0_12, %c0_13] : memref<2x4x4xf32, #tpu.memory_space<vmem>>, vector<2x4x4xf32>
    %c0_14 = arith.constant 0 : index
    %c0_15 = arith.constant 0 : index
    %c0_16 = arith.constant 0 : index
    %9 = vector.load %arg11[%c0_14, %c0_15, %c0_16] : memref<2x8x4xf32, #tpu.memory_space<vmem>>, vector<2x8x4xf32>
    %10 = vector.extract_strided_slice %8 {offsets = [0, 0, 0], sizes = [1, 4, 4], strides = [1, 1, 1]} : vector<2x4x4xf32> to vector<1x4x4xf32>
    %11 = vector.shape_cast %10 : vector<1x4x4xf32> to vector<4x4xf32>
    %12 = vector.extract_strided_slice %7 {offsets = [0, 0, 0], sizes = [1, 4, 16], strides = [1, 1, 1]} : vector<2x4x16xf32> to vector<1x4x16xf32>
    %13 = vector.shape_cast %12 : vector<1x4x16xf32> to vector<4x16xf32>
    %14 = tpu.concatenate %11, %13 in 1 : vector<4x4xf32>, vector<4x16xf32> -> vector<4x20xf32>
    %15 = vector.extract_strided_slice %8 {offsets = [1, 0, 0], sizes = [1, 4, 4], strides = [1, 1, 1]} : vector<2x4x4xf32> to vector<1x4x4xf32>
    %16 = vector.shape_cast %15 : vector<1x4x4xf32> to vector<4x4xf32>
    %17 = vector.extract_strided_slice %7 {offsets = [1, 0, 0], sizes = [1, 4, 16], strides = [1, 1, 1]} : vector<2x4x16xf32> to vector<1x4x16xf32>
    %18 = vector.shape_cast %17 : vector<1x4x16xf32> to vector<4x16xf32>
    %19 = tpu.concatenate %16, %18 in 1 : vector<4x4xf32>, vector<4x16xf32> -> vector<4x20xf32>
    %20 = vector.extract_strided_slice %14 {offsets = [0, 0], sizes = [4, 16], strides = [1, 1]} : vector<4x20xf32> to vector<4x16xf32>
    %21 = vector.extract_strided_slice %19 {offsets = [0, 0], sizes = [4, 16], strides = [1, 1]} : vector<4x20xf32> to vector<4x16xf32>
    %22 = tpu.concatenate %20, %21 in 1 : vector<4x16xf32>, vector<4x16xf32> -> vector<4x32xf32>
    %23 = vector.extract_strided_slice %14 {offsets = [0, 2], sizes = [4, 16], strides = [1, 1]} : vector<4x20xf32> to vector<4x16xf32>
    %24 = vector.extract_strided_slice %19 {offsets = [0, 2], sizes = [4, 16], strides = [1, 1]} : vector<4x20xf32> to vector<4x16xf32>
    %25 = tpu.concatenate %23, %24 in 1 : vector<4x16xf32>, vector<4x16xf32> -> vector<4x32xf32>
    %26 = vector.extract_strided_slice %14 {offsets = [0, 4], sizes = [4, 16], strides = [1, 1]} : vector<4x20xf32> to vector<4x16xf32>
    %27 = vector.extract_strided_slice %19 {offsets = [0, 4], sizes = [4, 16], strides = [1, 1]} : vector<4x20xf32> to vector<4x16xf32>
    %28 = tpu.concatenate %26, %27 in 1 : vector<4x16xf32>, vector<4x16xf32> -> vector<4x32xf32>
    %29 = tpu.concatenate %22, %25, %28 in 0 : vector<4x32xf32>, vector<4x32xf32>, vector<4x32xf32> -> vector<12x32xf32>
    %cst = arith.constant dense<0.000000e+00> : vector<8x32xf32>
    %30 = tpu.matmul %3, %29, %cst {dimension_numbers = #tpu.dot_dimension_numbers<[1], [0], [0], [1], [0, 0, 1, 1], [], []>} : vector<8x12xf32>, vector<12x32xf32>, vector<8x32xf32> -> vector<8x32xf32>
    %31 = vector.broadcast %5 : vector<8x1xf32> to vector<8x32xf32>
    %32 = arith.addf %30, %31 : vector<8x32xf32>
    %cst_17 = arith.constant 0.000000e+00 : f32
    %33 = vector.broadcast %cst_17 : f32 to vector<8x32xf32>
    %34 = arith.maximumf %32, %33 : vector<8x32xf32>
    %35 = vector.extract_strided_slice %9 {offsets = [0, 0, 0], sizes = [1, 8, 4], strides = [1, 1, 1]} : vector<2x8x4xf32> to vector<1x8x4xf32>
    %36 = vector.shape_cast %35 : vector<1x8x4xf32> to vector<8x4xf32>
    %37 = vector.extract_strided_slice %34 {offsets = [0, 0], sizes = [8, 16], strides = [1, 1]} : vector<8x32xf32> to vector<8x16xf32>
    %38 = tpu.concatenate %36, %37 in 1 : vector<8x4xf32>, vector<8x16xf32> -> vector<8x20xf32>
    %39 = vector.extract_strided_slice %9 {offsets = [1, 0, 0], sizes = [1, 8, 4], strides = [1, 1, 1]} : vector<2x8x4xf32> to vector<1x8x4xf32>
    %40 = vector.shape_cast %39 : vector<1x8x4xf32> to vector<8x4xf32>
    %41 = vector.extract_strided_slice %34 {offsets = [0, 16], sizes = [8, 16], strides = [1, 1]} : vector<8x32xf32> to vector<8x16xf32>
    %42 = tpu.concatenate %40, %41 in 1 : vector<8x4xf32>, vector<8x16xf32> -> vector<8x20xf32>
    %43 = vector.extract_strided_slice %38 {offsets = [0, 0], sizes = [8, 16], strides = [1, 1]} : vector<8x20xf32> to vector<8x16xf32>
    %44 = vector.extract_strided_slice %42 {offsets = [0, 0], sizes = [8, 16], strides = [1, 1]} : vector<8x20xf32> to vector<8x16xf32>
    %45 = tpu.concatenate %43, %44 in 1 : vector<8x16xf32>, vector<8x16xf32> -> vector<8x32xf32>
    %46 = vector.extract_strided_slice %38 {offsets = [0, 2], sizes = [8, 16], strides = [1, 1]} : vector<8x20xf32> to vector<8x16xf32>
    %47 = vector.extract_strided_slice %42 {offsets = [0, 2], sizes = [8, 16], strides = [1, 1]} : vector<8x20xf32> to vector<8x16xf32>
    %48 = tpu.concatenate %46, %47 in 1 : vector<8x16xf32>, vector<8x16xf32> -> vector<8x32xf32>
    %49 = vector.extract_strided_slice %38 {offsets = [0, 4], sizes = [8, 16], strides = [1, 1]} : vector<8x20xf32> to vector<8x16xf32>
    %50 = vector.extract_strided_slice %42 {offsets = [0, 4], sizes = [8, 16], strides = [1, 1]} : vector<8x20xf32> to vector<8x16xf32>
    %51 = tpu.concatenate %49, %50 in 1 : vector<8x16xf32>, vector<8x16xf32> -> vector<8x32xf32>
    %52 = tpu.concatenate %45, %48, %51 in 0 : vector<8x32xf32>, vector<8x32xf32>, vector<8x32xf32> -> vector<24x32xf32>
    %cst_18 = arith.constant dense<0.000000e+00> : vector<8x32xf32>
    %53 = tpu.matmul %4, %52, %cst_18 {dimension_numbers = #tpu.dot_dimension_numbers<[1], [0], [0], [1], [0, 0, 1, 1], [], []>} : vector<8x24xf32>, vector<24x32xf32>, vector<8x32xf32> -> vector<8x32xf32>
    %54 = vector.broadcast %6 : vector<8x1xf32> to vector<8x32xf32>
    %55 = arith.addf %53, %54 : vector<8x32xf32>
    %cst_19 = arith.constant 0.000000e+00 : f32
    %56 = vector.broadcast %cst_19 : f32 to vector<8x32xf32>
    %57 = arith.maximumf %55, %56 : vector<8x32xf32>
    %58 = vector.extract_strided_slice %7 {offsets = [0, 0, 0], sizes = [1, 4, 16], strides = [1, 1, 1]} : vector<2x4x16xf32> to vector<1x4x16xf32>
    %59 = vector.shape_cast %58 : vector<1x4x16xf32> to vector<4x16xf32>
    %60 = vector.extract_strided_slice %7 {offsets = [1, 0, 0], sizes = [1, 4, 16], strides = [1, 1, 1]} : vector<2x4x16xf32> to vector<1x4x16xf32>
    %61 = vector.shape_cast %60 : vector<1x4x16xf32> to vector<4x16xf32>
    %62 = tpu.concatenate %59, %61 in 1 : vector<4x16xf32>, vector<4x16xf32> -> vector<4x32xf32>
    %c0_20 = arith.constant 0 : index
    %c0_21 = arith.constant 0 : index
    %63 = vector.load %arg7[%c0_20, %c0_21] : memref<8x4xf32, #tpu.memory_space<vmem>>, vector<8x4xf32>
    %cst_22 = arith.constant dense<0.000000e+00> : vector<8x32xf32>
    %64 = tpu.matmul %63, %62, %cst_22 {dimension_numbers = #tpu.dot_dimension_numbers<[1], [0], [0], [1], [0, 0, 1, 1], [], []>} : vector<8x4xf32>, vector<4x32xf32>, vector<8x32xf32> -> vector<8x32xf32>
    %c0_23 = arith.constant 0 : index
    %c0_24 = arith.constant 0 : index
    %65 = vector.load %arg8[%c0_23, %c0_24] : memref<8x1xf32, #tpu.memory_space<vmem>>, vector<8x1xf32>
    %66 = vector.broadcast %65 : vector<8x1xf32> to vector<8x32xf32>
    %67 = arith.addf %64, %66 : vector<8x32xf32>
    %68 = arith.addf %57, %67 : vector<8x32xf32>
    %cst_25 = arith.constant 0.000000e+00 : f32
    %69 = vector.broadcast %cst_25 : f32 to vector<8x32xf32>
    %70 = arith.maximumf %68, %69 : vector<8x32xf32>
    %71 = vector.extract_strided_slice %70 {offsets = [0, 0], sizes = [8, 16], strides = [1, 1]} : vector<8x32xf32> to vector<8x16xf32>
    %c0_26 = arith.constant 0 : index
    %c0_27 = arith.constant 0 : index
    %c0_28 = arith.constant 0 : index
    %72 = vector.load %arg9[%c0_26, %c0_27, %c0_28] : memref<2x8x16xf32, #tpu.memory_space<vmem>>, vector<1x8x16xf32>
    %73 = vector.shape_cast %72 : vector<1x8x16xf32> to vector<8x16xf32>
    %74 = vector.shape_cast %71 : vector<8x16xf32> to vector<1x8x16xf32>
    tpu.vector_store %arg9[%c0_26, %c0_27, %c0_28], %74 {strides = array<i32>} : memref<2x8x16xf32, #tpu.memory_space<vmem>>, vector<1x8x16xf32>,
    %75 = vector.extract_strided_slice %70 {offsets = [0, 16], sizes = [8, 16], strides = [1, 1]} : vector<8x32xf32> to vector<8x16xf32>
    %c1 = arith.constant 1 : index
    %c0_29 = arith.constant 0 : index
    %c0_30 = arith.constant 0 : index
    %76 = vector.load %arg9[%c1, %c0_29, %c0_30] : memref<2x8x16xf32, #tpu.memory_space<vmem>>, vector<1x8x16xf32>
    %77 = vector.shape_cast %76 : vector<1x8x16xf32> to vector<8x16xf32>
    %78 = vector.shape_cast %75 : vector<8x16xf32> to vector<1x8x16xf32>
    tpu.vector_store %arg9[%c1, %c0_29, %c0_30], %78 {strides = array<i32>} : memref<2x8x16xf32, #tpu.memory_space<vmem>>, vector<1x8x16xf32>,
    return
  }
  func.func @transform_0(%arg0: i32, %arg1: i32) -> (i32, i32, i32) {
    %c0_i32 = arith.constant 0 : i32
    %c0_i32_0 = arith.constant 0 : i32
    return %arg0, %c0_i32, %arg1 : i32, i32, i32
  }
  func.func @transform_1(%arg0: i32, %arg1: i32) -> (i32, i32) {
    %c0_i32 = arith.constant 0 : i32
    %c0_i32_0 = arith.constant 0 : i32
    %c0_i32_1 = arith.constant 0 : i32
    return %c0_i32, %c0_i32_0 : i32, i32
  }
  func.func @transform_2(%arg0: i32, %arg1: i32) -> (i32, i32) {
    %c0_i32 = arith.constant 0 : i32
    %c0_i32_0 = arith.constant 0 : i32
    %c0_i32_1 = arith.constant 0 : i32
    return %c0_i32, %c0_i32_0 : i32, i32
  }
  func.func @transform_3(%arg0: i32, %arg1: i32) -> (i32, i32) {
    %c0_i32 = arith.constant 0 : i32
    %c0_i32_0 = arith.constant 0 : i32
    %c0_i32_1 = arith.constant 0 : i32
    return %c0_i32, %c0_i32_0 : i32, i32
  }
  func.func @transform_4(%arg0: i32, %arg1: i32) -> (i32, i32) {
    %c0_i32 = arith.constant 0 : i32
    %c0_i32_0 = arith.constant 0 : i32
    %c0_i32_1 = arith.constant 0 : i32
    return %c0_i32, %c0_i32_0 : i32, i32
  }
  func.func @transform_5(%arg0: i32, %arg1: i32) -> (i32, i32) {
    %c0_i32 = arith.constant 0 : i32
    %c0_i32_0 = arith.constant 0 : i32
    %c0_i32_1 = arith.constant 0 : i32
    return %c0_i32, %c0_i32_0 : i32, i32
  }
  func.func @transform_6(%arg0: i32, %arg1: i32) -> (i32, i32) {
    %c0_i32 = arith.constant 0 : i32
    %c0_i32_0 = arith.constant 0 : i32
    %c0_i32_1 = arith.constant 0 : i32
    return %c0_i32, %c0_i32_0 : i32, i32
  }
  func.func @transform_7(%arg0: i32, %arg1: i32) -> (i32, i32, i32) {
    %c0_i32 = arith.constant 0 : i32
    %c0_i32_0 = arith.constant 0 : i32
    return %arg0, %c0_i32, %arg1 : i32, i32, i32
  }
}

</mosaic_0001>

<llo_original>
// kernel: tpu_custom_call.1
$region0: #{tpu_custom_call.1}
  #allocation0 [shape = 'u32[]', space=smem, size = 0x4, offset = 0x4, fixed_abs, tag = 'smem constant byte address 0x4 - core index']
  #allocation1 [shape = 'u32[144,128]{1,0:T(1,128)}', space=vmem, size = 0x12000, scoped, tag = 'internal scratch']
  #allocation2 [shape = 'f32[2,4,4]{2,1,0:T(4,128)}', space=vmem, size = 0x1000, scoped, tag = 'scratch operand']
  #allocation3 [shape = 'f32[2,8,4]{2,1,0:T(8,128)}', space=vmem, size = 0x2000, scoped, tag = 'scratch operand']
  %s0 = inlined_call_operand.vmem [shape: f32[2,4,16], index: 0, kind: input, shape index: {}]
  %s1 = inlined_call_operand.vmem [shape: f32[8,12], index: 1, kind: input, shape index: {}]
  %s2 = inlined_call_operand.vmem [shape: f32[8,1], index: 2, kind: input, shape index: {}]
  %s3 = inlined_call_operand.vmem [shape: f32[8,24], index: 3, kind: input, shape index: {}]
  %s4 = inlined_call_operand.vmem [shape: f32[8,1], index: 4, kind: input, shape index: {}]
  %s5 = inlined_call_operand.vmem [shape: f32[8,4], index: 5, kind: input, shape index: {}]
  %s6 = inlined_call_operand.vmem [shape: f32[8,1], index: 6, kind: input, shape index: {}]
  %s7 = inlined_call_operand.hbm [shape: f32[2,8,16], index: 7, kind: output, shape index: {}]
  %s8 = sld [smem:[#allocation0]]
  $region42: #{tpu_custom_call.1} parent=0
    _
  %s10 = ssub.s32 1, %s8
  %s11 = scalar_select 0, %s10, %s8
  $region1: #{tpu_custom_call.1} parent=0
    #allocation4 [shape = 'u8[8192]{0}', space=vmem, size = 0x2000, scoped, tag = 'output window, operand 0, single buffered']
    #allocation5 [shape = 's32[1]{0}', space=sflag, size = 0x4, scoped, tag = 'scoped memory for tpu_custom_call.1']
    %12 = vsyncpa [#allocation5], 0
    // Predicated region
    $region2: #{tpu_custom_call.1} parent=1 // pred_check
      _
    $region3: #{tpu_custom_call.1} parent=1 // pred_check_branch
      %14 = sbr.rel (0) target = $region5
    $region4: #{tpu_custom_call.1} parent=1 // pred_region
      _
    $region5: #{tpu_custom_call.1} parent=1 // pred_fallthru
      _
    // Predicated region
    $region6: #{tpu_custom_call.1} parent=1 // pred_check
      _
    $region7: #{tpu_custom_call.1} parent=1 // pred_check_branch
      %16 = sbr.rel (0) target = $region9
    $region8: #{tpu_custom_call.1} parent=1 // pred_region
      _
    $region9: #{tpu_custom_call.1} parent=1 // pred_fallthru
      _
    // Predicated region
    $region10: #{tpu_custom_call.1} parent=1 // pred_check
      _
    $region11: #{tpu_custom_call.1} parent=1 // pred_check_branch
      %18 = sbr.rel (0) target = $region13
    $region12: #{tpu_custom_call.1} parent=1 // pred_region
      _
    $region13: #{tpu_custom_call.1} parent=1 // pred_fallthru
      _
    // Predicated region
    $region14: #{tpu_custom_call.1} parent=1 // pred_check
      _
    $region15: #{tpu_custom_call.1} parent=1 // pred_check_branch
      %20 = sbr.rel (0) target = $region17
    $region16: #{tpu_custom_call.1} parent=1 // pred_region
      _
    $region17: #{tpu_custom_call.1} parent=1 // pred_fallthru
      _
    // Predicated region
    $region18: #{tpu_custom_call.1} parent=1 // pred_check
      _
    $region19: #{tpu_custom_call.1} parent=1 // pred_check_branch
      %22 = sbr.rel (0) target = $region21
    $region20: #{tpu_custom_call.1} parent=1 // pred_region
      _
    $region21: #{tpu_custom_call.1} parent=1 // pred_fallthru
      _
    // Predicated region
    $region22: #{tpu_custom_call.1} parent=1 // pred_check
      _
    $region23: #{tpu_custom_call.1} parent=1 // pred_check_branch
      %24 = sbr.rel (0) target = $region25
    $region24: #{tpu_custom_call.1} parent=1 // pred_region
      _
    $region25: #{tpu_custom_call.1} parent=1 // pred_fallthru
      _
    // Predicated region
    $region26: #{tpu_custom_call.1} parent=1 // pred_check
      _
    $region27: #{tpu_custom_call.1} parent=1 // pred_check_branch
      %26 = sbr.rel (0) target = $region29
    $region28: #{tpu_custom_call.1} parent=1 // pred_region
      _
    $region29: #{tpu_custom_call.1} parent=1 // pred_fallthru
      _
    %p27 = scmp.eq.s32.totalorder 0, 0
    // Predicated region
    $region30: #{tpu_custom_call.1} parent=1 // pred_check
      %p28 = pneg %p27
    $region31: #{tpu_custom_call.1} parent=1 // pred_check_branch
      %30 = sbr.rel (%p28) target = $region33
    $region32: #{tpu_custom_call.1} parent=1 // pred_region
      %vm31 = vcmask 27648
      %32 = vst.msk [vmem:[#allocation2] sm:$0xf] %vm31, 0.0
      %33 = vst.msk [vmem:[#allocation2 + $0x4] sm:$0xf] %vm31, 0.0
      %vm34 = vcmask 31744
      %35 = vst.msk [vmem:[#allocation3] sm:$0xff] %vm34, 0.0
      %36 = vst.msk [vmem:[#allocation3 + $0x8] sm:$0xff] %vm34, 0.0
    $region33: #{tpu_custom_call.1} parent=1 // pred_fallthru
      _
    %v37 = vld [vmem:[%s1] sm:$0xff]
    %v38 = vld [vmem:[%s3] sm:$0xff]
    %v39 = vld [vmem:[%s2] sm:$0xff]
    %v40 = vld [vmem:[%s4] sm:$0xff]
    %v41 = vld [vmem:[%s0] sm:$0xf]
    %v42 = vld [vmem:[%s0 + $0x4] sm:$0xf]
    %v43 = vld [vmem:[#allocation2] sm:$0xf]
    %v44 = vld [vmem:[#allocation2 + $0x4] sm:$0xf]
    %v45 = vld [vmem:[#allocation3] sm:$0xff]
    %v46 = vld [vmem:[#allocation3 + $0x8] sm:$0xff]
    %48 = vrot.lane.b32.xlu0 %v41, 4
    %v49 = vpop.permute.xlu0 %48
    %vm51 = vcmask 31744
    %v52 = vsel %vm51, %v43, %v49
    %54 = vrot.lane.b32.xlu0 %v42, 4
    %v55 = vpop.permute.xlu0 %54
    %v57 = vsel %vm51, %v44, %v55
    %59 = vrot.lane.b32.xlu0 %v57, 16
    %v60 = vpop.permute.xlu0 %59
    %vm62 = vcmask 130048
    %v63 = vsel %vm62, %v52, %v60
    %65 = vrot.lane.b32.xlu0 %v52, 126
    %v66 = vpop.permute.xlu0 %65
    %68 = vrot.lane.b32.xlu0 %v57, 14
    %v69 = vpop.permute.xlu0 %68
    %v71 = vsel %vm62, %v66, %v69
    %72 = vrot.lane.b32.xlu0 %v52, 124
    %v73 = vpop.permute.xlu0 %72
    %75 = vrot.lane.b32.xlu0 %v57, 12
    %v76 = vpop.permute.xlu0 %75
    %v78 = vsel %vm62, %v73, %v76
    %v80 = vrot.slane %v71, 4
    %vm82 = vcmask 1043456
    %v83 = vsel %vm82, %v63, %v80
    %85 = vset.pattern.permute.xlu0 0
    %86 = vperm.xlu0 %85, %v39
    %v87 = vpop.permute.xlu0 %86
    %vm89 = vcmask 97280
    %v91 = vsel %vm89, %v37, 0
    %v94 = vsel %vm82, %v78, 0
    %96 = vmatprep.subr.mxu0 0.0
    %97 = vmatpush1.msra.mxu0 0.0
    %98 = vmatprep.subr.mxu0 0.0
    %99 = vmatpush1.msra.mxu0 0.0
    %100 = vmatprep.subr.mxu0 0.0
    %101 = vmatpush1.msra.mxu0 0.0
    %102 = vmatprep.subr.mxu0 0.0
    %103 = vmatpush1.msra.mxu0 0.0
    %104 = vmatprep.subr.mxu0 0.0
    %105 = vmatpush1.msra.mxu0 0.0
    %106 = vmatprep.subr.mxu0 0.0
    %107 = vmatpush1.msra.mxu0 0.0
    %108 = vmatprep.subr.mxu0 0.0
    %109 = vmatpush1.msra.mxu0 0.0
    %110 = vmatprep.subr.mxu0 0.0
    %111 = vmatpush1.msra.mxu0 0.0
    %112 = vmatprep.subr.mxu0 0.0
    %113 = vmatpush1.msra.mxu0 0.0
    %114 = vmatprep.subr.mxu0 0.0
    %115 = vmatpush1.msra.mxu0 0.0
    %116 = vmatprep.subr.mxu0 0.0
    %117 = vmatpush1.msra.mxu0 0.0
    %118 = vmatprep.subr.mxu0 0.0
    %119 = vmatpush1.msra.mxu0 0.0
    %120 = vmatprep.subr.mxu0 0.0
    %121 = vmatpush1.msra.mxu0 0.0
    %122 = vmatprep.subr.mxu0 0.0
    %123 = vmatpush1.msra.mxu0 0.0
    %124 = vmatprep.subr.mxu0 0.0
    %125 = vmatpush1.msra.mxu0 %v94
    %126 = vmatprep.subr.mxu0 0.0
    %127 = vmatpush1.msra.mxu0 %v83
    %128 = vmatprep.subr.mxu0 0.0
    %129 = vmatpush2.msra.mxu0 0.0
    %130 = vmatprep.subr.mxu0 0.0
    %131 = vmatpush2.msra.mxu0 0.0
    %132 = vmatprep.subr.mxu0 0.0
    %133 = vmatpush2.msra.mxu0 0.0
    %134 = vmatprep.subr.mxu0 0.0
    %135 = vmatpush2.msra.mxu0 0.0
    %136 = vmatprep.subr.mxu0 0.0
    %137 = vmatpush2.msra.mxu0 0.0
    %138 = vmatprep.subr.mxu0 0.0
    %139 = vmatpush2.msra.mxu0 0.0
    %140 = vmatprep.subr.mxu0 0.0
    %141 = vmatpush2.msra.mxu0 0.0
    %142 = vmatprep.subr.mxu0 0.0
    %143 = vmatpush2.msra.mxu0 0.0
    %144 = vmatprep.subr.mxu0 0.0
    %145 = vmatpush2.msra.mxu0 0.0
    %146 = vmatprep.subr.mxu0 0.0
    %147 = vmatpush2.msra.mxu0 0.0
    %148 = vmatprep.subr.mxu0 0.0
    %149 = vmatpush2.msra.mxu0 0.0
    %150 = vmatprep.subr.mxu0 0.0
    %151 = vmatpush2.msra.mxu0 0.0
    %152 = vmatprep.subr.mxu0 0.0
    %153 = vmatpush2.msra.mxu0 0.0
    %154 = vmatprep.subr.mxu0 0.0
    %155 = vmatpush2.msra.mxu0 0.0
    %156 = vmatprep.subr.mxu0 0.0
    %157 = vmatpush2.msra.mxu0 0.0
    %158 = vmatprep.subr.mxu0 0.0
    %159 = vmatpush2.msra.mxu0 0.0
    %160 = vmatprep.mubr.f32.mxu0 0.0
    %161 = vmatmul.mubr.f32.gmra.mxu0 %v91
    %v162 = vpop.f32.mrf.mxu0
    %v163 = vadd.f32 %v87, %v162
    %v164 = vpop.f32.mrf.mxu0
    %165 = vdwg.mxu0
    %v166 = vmax.f32 %v163, 0.0
    %168 = vrot.lane.b32.xlu0 %v166, 4
    %v169 = vpop.permute.xlu0 %168
    %v171 = vsel %vm51, %v45, %v169
    %172 = vrot.lane.b32.xlu0 %v166, 116
    %v173 = vpop.permute.xlu0 %172
    %v175 = vsel %vm51, %v46, %v173
    %177 = vrot.lane.b32.xlu0 %v175, 16
    %v178 = vpop.permute.xlu0 %177
    %v180 = vsel %vm62, %v171, %v178
    %182 = vrot.lane.b32.xlu0 %v171, 126
    %v183 = vpop.permute.xlu0 %182
    %185 = vrot.lane.b32.xlu0 %v175, 14
    %v186 = vpop.permute.xlu0 %185
    %v188 = vsel %vm62, %v183, %v186
    %189 = vrot.lane.b32.xlu0 %v171, 124
    %v190 = vpop.permute.xlu0 %189
    %192 = vrot.lane.b32.xlu0 %v175, 12
    %v193 = vpop.permute.xlu0 %192
    %v195 = vsel %vm62, %v190, %v193
    %197 = vset.pattern.permute.xlu0 0
    %198 = vperm.xlu0 %197, %v40
    %v199 = vpop.permute.xlu0 %198
    %vm201 = vcmask 195584
    %v203 = vsel %vm201, %v38, 0
    %205 = vmatprep.subr.mxu0 0.0
    %206 = vmatpush1.msra.mxu0 0.0
    %207 = vmatprep.subr.mxu0 0.0
    %208 = vmatpush1.msra.mxu0 0.0
    %209 = vmatprep.subr.mxu0 0.0
    %210 = vmatpush1.msra.mxu0 0.0
    %211 = vmatprep.subr.mxu0 0.0
    %212 = vmatpush1.msra.mxu0 0.0
    %213 = vmatprep.subr.mxu0 0.0
    %214 = vmatpush1.msra.mxu0 0.0
    %215 = vmatprep.subr.mxu0 0.0
    %216 = vmatpush1.msra.mxu0 0.0
    %217 = vmatprep.subr.mxu0 0.0
    %218 = vmatpush1.msra.mxu0 0.0
    %219 = vmatprep.subr.mxu0 0.0
    %220 = vmatpush1.msra.mxu0 0.0
    %221 = vmatprep.subr.mxu0 0.0
    %222 = vmatpush1.msra.mxu0 0.0
    %223 = vmatprep.subr.mxu0 0.0
    %224 = vmatpush1.msra.mxu0 0.0
    %225 = vmatprep.subr.mxu0 0.0
    %226 = vmatpush1.msra.mxu0 0.0
    %227 = vmatprep.subr.mxu0 0.0
    %228 = vmatpush1.msra.mxu0 0.0
    %229 = vmatprep.subr.mxu0 0.0
    %230 = vmatpush1.msra.mxu0 0.0
    %231 = vmatprep.subr.mxu0 0.0
    %232 = vmatpush1.msra.mxu0 %v195
    %233 = vmatprep.subr.mxu0 0.0
    %234 = vmatpush1.msra.mxu0 %v188
    %235 = vmatprep.subr.mxu0 0.0
    %236 = vmatpush1.msra.mxu0 %v180
    %237 = vmatprep.subr.mxu0 0.0
    %238 = vmatpush2.msra.mxu0 0.0
    %239 = vmatprep.subr.mxu0 0.0
    %240 = vmatpush2.msra.mxu0 0.0
    %241 = vmatprep.subr.mxu0 0.0
    %242 = vmatpush2.msra.mxu0 0.0
    %243 = vmatprep.subr.mxu0 0.0
    %244 = vmatpush2.msra.mxu0 0.0
    %245 = vmatprep.subr.mxu0 0.0
    %246 = vmatpush2.msra.mxu0 0.0
    %247 = vmatprep.subr.mxu0 0.0
    %248 = vmatpush2.msra.mxu0 0.0
    %249 = vmatprep.subr.mxu0 0.0
    %250 = vmatpush2.msra.mxu0 0.0
    %251 = vmatprep.subr.mxu0 0.0
    %252 = vmatpush2.msra.mxu0 0.0
    %253 = vmatprep.subr.mxu0 0.0
    %254 = vmatpush2.msra.mxu0 0.0
    %255 = vmatprep.subr.mxu0 0.0
    %256 = vmatpush2.msra.mxu0 0.0
    %257 = vmatprep.subr.mxu0 0.0
    %258 = vmatpush2.msra.mxu0 0.0
    %259 = vmatprep.subr.mxu0 0.0
    %260 = vmatpush2.msra.mxu0 0.0
    %261 = vmatprep.subr.mxu0 0.0
    %262 = vmatpush2.msra.mxu0 0.0
    %263 = vmatprep.subr.mxu0 0.0
    %264 = vmatpush2.msra.mxu0 0.0
    %265 = vmatprep.subr.mxu0 0.0
    %266 = vmatpush2.msra.mxu0 0.0
    %267 = vmatprep.subr.mxu0 0.0
    %268 = vmatpush2.msra.mxu0 0.0
    %269 = vmatprep.mubr.f32.mxu0 0.0
    %270 = vmatmul.mubr.f32.gmra.mxu0 %v203
    %v271 = vpop.f32.mrf.mxu0
    %v272 = vadd.f32 %v199, %v271
    %v273 = vpop.f32.mrf.mxu0
    %274 = vdwg.mxu0
    %v275 = vmax.f32 %v272, 0.0
    %276 = vrot.lane.b32.xlu0 %v42, 16
    %v277 = vpop.permute.xlu0 %276
    %v279 = vsel %vm62, %v41, %v277
    %v280 = vld [vmem:[%s5] sm:$0xff]
    %v281 = vld [vmem:[%s6] sm:$0xff]
    %283 = vset.pattern.permute.xlu0 0
    %284 = vperm.xlu0 %283, %v281
    %v285 = vpop.permute.xlu0 %284
    %v288 = vsel %vm51, %v280, 0
    %v291 = vsel %vm82, %v279, 0
    %293 = vmatprep.subr.mxu0 0.0
    %294 = vmatpush1.msra.mxu0 0.0
    %295 = vmatprep.subr.mxu0 0.0
    %296 = vmatpush1.msra.mxu0 0.0
    %297 = vmatprep.subr.mxu0 0.0
    %298 = vmatpush1.msra.mxu0 0.0
    %299 = vmatprep.subr.mxu0 0.0
    %300 = vmatpush1.msra.mxu0 0.0
    %301 = vmatprep.subr.mxu0 0.0
    %302 = vmatpush1.msra.mxu0 0.0
    %303 = vmatprep.subr.mxu0 0.0
    %304 = vmatpush1.msra.mxu0 0.0
    %305 = vmatprep.subr.mxu0 0.0
    %306 = vmatpush1.msra.mxu0 0.0
    %307 = vmatprep.subr.mxu0 0.0
    %308 = vmatpush1.msra.mxu0 0.0
    %309 = vmatprep.subr.mxu0 0.0
    %310 = vmatpush1.msra.mxu0 0.0
    %311 = vmatprep.subr.mxu0 0.0
    %312 = vmatpush1.msra.mxu0 0.0
    %313 = vmatprep.subr.mxu0 0.0
    %314 = vmatpush1.msra.mxu0 0.0
    %315 = vmatprep.subr.mxu0 0.0
    %316 = vmatpush1.msra.mxu0 0.0
    %317 = vmatprep.subr.mxu0 0.0
    %318 = vmatpush1.msra.mxu0 0.0
    %319 = vmatprep.subr.mxu0 0.0
    %320 = vmatpush1.msra.mxu0 0.0
    %321 = vmatprep.subr.mxu0 0.0
    %322 = vmatpush1.msra.mxu0 0.0
    %323 = vmatprep.subr.mxu0 0.0
    %324 = vmatpush1.msra.mxu0 %v291
    %325 = vmatprep.subr.mxu0 0.0
    %326 = vmatpush2.msra.mxu0 0.0
    %327 = vmatprep.subr.mxu0 0.0
    %328 = vmatpush2.msra.mxu0 0.0
    %329 = vmatprep.subr.mxu0 0.0
    %330 = vmatpush2.msra.mxu0 0.0
    %331 = vmatprep.subr.mxu0 0.0
    %332 = vmatpush2.msra.mxu0 0.0
    %333 = vmatprep.subr.mxu0 0.0
    %334 = vmatpush2.msra.mxu0 0.0
    %335 = vmatprep.subr.mxu0 0.0
    %336 = vmatpush2.msra.mxu0 0.0
    %337 = vmatprep.subr.mxu0 0.0
    %338 = vmatpush2.msra.mxu0 0.0
    %339 = vmatprep.subr.mxu0 0.0
    %340 = vmatpush2.msra.mxu0 0.0
    %341 = vmatprep.subr.mxu0 0.0
    %342 = vmatpush2.msra.mxu0 0.0
    %343 = vmatprep.subr.mxu0 0.0
    %344 = vmatpush2.msra.mxu0 0.0
    %345 = vmatprep.subr.mxu0 0.0
    %346 = vmatpush2.msra.mxu0 0.0
    %347 = vmatprep.subr.mxu0 0.0
    %348 = vmatpush2.msra.mxu0 0.0
    %349 = vmatprep.subr.mxu0 0.0
    %350 = vmatpush2.msra.mxu0 0.0
    %351 = vmatprep.subr.mxu0 0.0
    %352 = vmatpush2.msra.mxu0 0.0
    %353 = vmatprep.subr.mxu0 0.0
    %354 = vmatpush2.msra.mxu0 0.0
    %355 = vmatprep.subr.mxu0 0.0
    %356 = vmatpush2.msra.mxu0 0.0
    %357 = vmatprep.mubr.f32.mxu0 0.0
    %358 = vmatmul.mubr.f32.gmra.mxu0 %v288
    %v359 = vpop.f32.mrf.mxu0
    %v360 = vadd.f32 %v285, %v359
    %v361 = vpop.f32.mrf.mxu0
    %362 = vdwg.mxu0
    %v363 = vadd.f32 %v275, %v360
    %v364 = vmax.f32 %v363, 0.0
    %365 = vst.msk [vmem:[#allocation4] sm:$0xff] %vm62, %v364
    %367 = vrot.lane.b32.xlu0 %v364, 112
    %v368 = vpop.permute.xlu0 %367
    %s370 = scalar_lea.vmem [#allocation4], 8
    %371 = vst.msk [vmem:[%s370] sm:$0xff] %vm62, %v368
    // Predicated region
    $region34: #{tpu_custom_call.1} parent=1 // pred_check
      _
    $region35: #{tpu_custom_call.1} parent=1 // pred_check_branch
      %373 = sbr.rel (0) target = $region37
    $region36: #{tpu_custom_call.1} parent=1 // pred_region
      %s375 = ssub.s32 256, 256
      %376 = vsyncadd [#allocation5], %s375
      %s377 = sshll.u32 [#allocation4], 4
      %s378 = int_to_ptr.vmem [resolvable:$true] %s377
      %383 = dma.vmem_to_hbm [thread:$0]  %s378, 256, %s7, [#allocation5], 128, 128, 8
    $region37: #{tpu_custom_call.1} parent=1 // pred_fallthru
      _
    // Predicated region
    $region38: #{tpu_custom_call.1} parent=1 // pred_check
      _
    $region39: #{tpu_custom_call.1} parent=1 // pred_check_branch
      %385 = sbr.rel (0) target = $region41
    $region40: #{tpu_custom_call.1} parent=1 // pred_region
      %386 = dma.done [#allocation5], 256
    $region41: #{tpu_custom_call.1} parent=1 // pred_fallthru
      _
    %387 = vsyncpa [#allocation5], 1

</llo_original>
